<compile_context>
chip_gen: v6e
topology: v6e:2x2x1
jax: 0.10.0
libtpu: 0.0.40
codegen_flags: <defaults>
</compile_context>

<pallas_src>
import functools
import math

import jax
import jax.numpy as jnp
from jax.experimental import pallas as pl
from jax.experimental.pallas import tpu as pltpu


def _round_up(x, m):
    return ((x + m - 1) // m) * m


# ------------------------------ fused kernel -------------------------------

def _make_fused_kernel(norm, activation, with_bias):
    """Kernel: o[n] = act(instnorm(patches[n] @ W (+ b)))  for one batch elem."""

    def _epilogue(y):
        # y: (P, Cpad) f32
        if norm == "instance":
            mean = jnp.mean(y, axis=0, keepdims=True)          # (1, Cpad)
            yc = y - mean
            var = jnp.mean(yc * yc, axis=0, keepdims=True)     # biased var
            y = yc * jax.lax.rsqrt(var + 1e-5)                 # eps=1e-5, affine=False
        if activation == "relu":
            y = jnp.maximum(y, 0.0)
        elif activation == "leaky":
            y = jnp.where(y >= 0.0, y, 0.2 * y)
        return y

    if with_bias:
        def kernel(x_ref, w_ref, b_ref, o_ref):
            # x: (1, P, KKpad) bf16, w: (KKpad, Cpad) bf16, b: (1, Cpad) f32
            y = jnp.dot(x_ref[0], w_ref[...], preferred_element_type=jnp.float32)
            o_ref[0] = _epilogue(y + b_ref[...])
    else:
        def kernel(x_ref, w_ref, o_ref):
            y = jnp.dot(x_ref[0], w_ref[...], preferred_element_type=jnp.float32)
            o_ref[0] = _epilogue(y)
    return kernel


# -------------------------------- JAX glue ---------------------------------

def _im2col(x_nhwc, k, stride, pad):
    """(N, H, W, C) -> (N, OH*OW, K*K*C), row order (ki*K + kj)*C + ci."""
    x = jnp.pad(x_nhwc, ((0, 0), (pad, pad), (pad, pad), (0, 0)))
    n, h, w, c = x.shape
    oh = (h - k) // stride + 1
    ow = (w - k) // stride + 1
    patches = []
    for di in range(k):
        for dj in range(k):
            patches.append(
                x[:, di:di + stride * oh:stride, dj:dj + stride * ow:stride, :]
            )
    p = jnp.stack(patches, axis=3)  # (N, OH, OW, K*K, C)
    return p.reshape(n, oh * ow, k * k * c), oh, ow


def prepare_conv_block_params(w_oihw, bias, norm):
    """One-time weight prep: (Cout,Cin,K,K) -> padded bf16 (K*K*Cin_pad, Cout_pad)."""
    cout, cin, k, _ = w_oihw.shape
    kk = k * k * cin
    kk_pad = _round_up(kk, 128)
    c_pad = _round_up(cout, 128)
    w_mat = jnp.transpose(w_oihw, (2, 3, 1, 0)).reshape(kk, cout)
    w_mat = jnp.pad(w_mat, ((0, kk_pad - kk), (0, c_pad - cout))).astype(jnp.bfloat16)
    if norm == "instance" or bias is None:
        # Conv bias is exactly cancelled by InstanceNorm's mean subtraction.
        b_pad = None
    else:
        b_pad = jnp.pad(bias.astype(jnp.float32), (0, c_pad - cout)).reshape(1, c_pad)
    return w_mat, b_pad


def conv_block_forward(x_nchw, w_mat, bias_pad, *, kernel_size, stride,
                       out_channels, norm="instance", activation="relu"):
    """Fused Conv2d(pad=(k-1)//2) + InstanceNorm2d + activation.  NCHW in/out."""
    k = kernel_size
    pad = (k - 1) // 2
    n = x_nchw.shape[0]
    kk_pad, c_pad = w_mat.shape

    x = jnp.transpose(x_nchw, (0, 2, 3, 1))             # NCHW -> NHWC
    patches, oh, ow = _im2col(x, k, stride, pad)        # (N, P, K*K*Cin)
    p, kk = patches.shape[1], patches.shape[2]
    if kk_pad > kk:                                     # pad reduction dim to 128x
        patches = jnp.pad(patches, ((0, 0), (0, 0), (0, kk_pad - kk)))
    patches = patches.astype(jnp.bfloat16)

    with_bias = bias_pad is not None
    kernel = _make_fused_kernel(norm, activation, with_bias)

    in_specs = [
        pl.BlockSpec((1, p, kk_pad), lambda i: (i, 0, 0)),   # per-batch patches
        pl.BlockSpec((kk_pad, c_pad), lambda i: (0, 0)),     # weights, resident
    ]
    operands = [patches, w_mat]
    if with_bias:
        in_specs.append(pl.BlockSpec((1, c_pad), lambda i: (0, 0)))
        operands.append(bias_pad)

    out = pl.pallas_call(
        kernel,
        grid=(n,),
        in_specs=in_specs,
        out_specs=pl.BlockSpec((1, p, c_pad), lambda i: (i, 0, 0)),
        out_shape=jax.ShapeDtypeStruct((n, p, c_pad), jnp.float32),
        compiler_params=pltpu.CompilerParams(dimension_semantics=("parallel",)),
    )(*operands)

    out = out[:, :, :out_channels].reshape(n, oh, ow, out_channels)
    return jnp.transpose(out, (0, 3, 1, 2))              # NHWC -> NCHW


# -------------------------- pure-JAX reference -----------------------------

def _ref_conv_block(x, w, b, stride, norm, activation):
    """Reference (f32 conv on bf16-rounded inputs, to match MXU quantization)."""
    pad = (w.shape[2] - 1) // 2
    xq = x.astype(jnp.bfloat16).astype(jnp.float32)
    wq = w.astype(jnp.bfloat16).astype(jnp.float32)
    y = jax.lax.conv_general_dilated(
        xq, wq, (stride, stride), [(pad, pad), (pad, pad)],
        dimension_numbers=("NCHW", "OIHW", "NCHW"))
    y = y + b.reshape(1, -1, 1, 1)
    if norm == "instance":
        mean = jnp.mean(y, axis=(2, 3), keepdims=True)
        var = jnp.mean((y - mean) ** 2, axis=(2, 3), keepdims=True)
        y = (y - mean) * jax.lax.rsqrt(var + 1e-5)
    if activation == "relu":
        y = jnp.maximum(y, 0.0)
    elif activation == "leaky":
        y = jnp.where(y >= 0.0, y, 0.2 * y)
    return y


# ----------------------------------- main -----------------------------------

if __name__ == "__main__":
    key = jax.random.PRNGKey(0)
    N, CIN, H, W = 2, 4, 16, 16
    key, kx = jax.random.split(key)
    x = jax.random.normal(kx, (N, CIN, H, W), jnp.float32)

    # --- config 1: module defaults (stride=1, norm='instance', act='relu') ---
    COUT1, K1, S1 = 64, 3, 1
    key, kw1, kb1 = jax.random.split(key, 3)
    bound1 = 1.0 / math.sqrt(CIN * K1 * K1)
    w1 = jax.random.uniform(kw1, (COUT1, CIN, K1, K1), jnp.float32, -bound1, bound1)
    b1 = jax.random.uniform(kb1, (COUT1,), jnp.float32, -bound1, bound1)
    w1_mat, b1_pad = prepare_conv_block_params(w1, b1, norm="instance")

    fwd1 = jax.jit(functools.partial(
        conv_block_forward, kernel_size=K1, stride=S1, out_channels=COUT1,
        norm="instance", activation="relu"))
    out1 = jax.block_until_ready(fwd1(x, w1_mat, b1_pad))
    assert out1.shape == (N, COUT1, H, W), out1.shape
    assert bool(jnp.all(jnp.isfinite(out1)))
    ref1 = _ref_conv_block(x, w1, b1, S1, "instance", "relu")
    err1 = float(jnp.max(jnp.abs(out1 - ref1)))
    assert err1 < 1e-2, f"config1 max err {err1}"

    # --- config 2: stride=2, k=5, norm='instance', act='leaky' ---
    COUT2, K2, S2 = 32, 5, 2
    key, kw2, kb2 = jax.random.split(key, 3)
    bound2 = 1.0 / math.sqrt(CIN * K2 * K2)
    w2 = jax.random.uniform(kw2, (COUT2, CIN, K2, K2), jnp.float32, -bound2, bound2)
    b2 = jax.random.uniform(kb2, (COUT2,), jnp.float32, -bound2, bound2)
    w2_mat, b2_pad = prepare_conv_block_params(w2, b2, norm="instance")

    fwd2 = jax.jit(functools.partial(
        conv_block_forward, kernel_size=K2, stride=S2, out_channels=COUT2,
        norm="instance", activation="leaky"))
    out2 = jax.block_until_ready(fwd2(x, w2_mat, b2_pad))
    assert out2.shape == (N, COUT2, H // 2, W // 2), out2.shape
    assert bool(jnp.all(jnp.isfinite(out2)))
    ref2 = _ref_conv_block(x, w2, b2, S2, "instance", "leaky")
    err2 = float(jnp.max(jnp.abs(out2 - ref2)))
    assert err2 < 1e-2, f"config2 max err {err2}"

    print("KERNEL_OK")
</pallas_src>

<mosaic_0001>
module attributes {stable_mosaic.version = 11 : i64} {
  func.func @kernel(%arg0: i32, %arg1: memref<1x256x128xbf16, #tpu.memory_space<vmem>>, %arg2: memref<128x128xbf16, #tpu.memory_space<vmem>>, %arg3: memref<1x256x128xf32, #tpu.memory_space<vmem>>) attributes {dimension_semantics = [#tpu.dimension_semantics<parallel>], iteration_bounds = array<i64: 2>, scalar_prefetch = 0 : i64, scratch_operands = 0 : i64, tpu.core_type = #tpu.core_type<tc>, window_params = [{transform_indices = @transform_0, window_bounds = array<i64: 1, 256, 128>}, {pipeline_mode = #tpu.pipeline_mode<synchronous>, transform_indices = @transform_1, window_bounds = array<i64: 128, 128>}, {transform_indices = @transform_2, window_bounds = array<i64: 1, 256, 128>}]} {
    %c0 = arith.constant 0 : index
    %c0_0 = arith.constant 0 : index
    %c0_1 = arith.constant 0 : index
    %0 = vector.load %arg1[%c0, %c0_0, %c0_1] : memref<1x256x128xbf16, #tpu.memory_space<vmem>>, vector<1x256x128xbf16>
    %1 = vector.shape_cast %0 : vector<1x256x128xbf16> to vector<256x128xbf16>
    %c0_2 = arith.constant 0 : index
    %c0_3 = arith.constant 0 : index
    %2 = vector.load %arg2[%c0_2, %c0_3] : memref<128x128xbf16, #tpu.memory_space<vmem>>, vector<128x128xbf16>
    %cst = arith.constant dense<0.000000e+00> : vector<256x128xf32>
    %3 = tpu.matmul %1, %2, %cst {dimension_numbers = #tpu.dot_dimension_numbers<[1], [0], [0], [1], [0, 0, 1, 1], [], []>} : vector<256x128xbf16>, vector<128x128xbf16>, vector<256x128xf32> -> vector<256x128xf32>
    %cst_4 = arith.constant dense<0.000000e+00> : vector<128xf32>
    %4 = vector.multi_reduction <add>, %3, %cst_4 [0] : vector<256x128xf32> to vector<128xf32>
    %5 = vector.shape_cast %4 : vector<128xf32> to vector<1x128xf32>
    %cst_5 = arith.constant 2.560000e+02 : f32
    %6 = vector.broadcast %cst_5 : f32 to vector<1x128xf32>
    %7 = arith.divf %5, %6 : vector<1x128xf32>
    %8 = vector.broadcast %7 : vector<1x128xf32> to vector<256x128xf32>
    %9 = arith.subf %3, %8 : vector<256x128xf32>
    %10 = arith.mulf %9, %9 : vector<256x128xf32>
    %cst_6 = arith.constant dense<0.000000e+00> : vector<128xf32>
    %11 = vector.multi_reduction <add>, %10, %cst_6 [0] : vector<256x128xf32> to vector<128xf32>
    %12 = vector.shape_cast %11 : vector<128xf32> to vector<1x128xf32>
    %cst_7 = arith.constant 2.560000e+02 : f32
    %13 = vector.broadcast %cst_7 : f32 to vector<1x128xf32>
    %14 = arith.divf %12, %13 : vector<1x128xf32>
    %cst_8 = arith.constant 9.99999974E-6 : f32
    %15 = vector.broadcast %cst_8 : f32 to vector<1x128xf32>
    %16 = arith.addf %14, %15 : vector<1x128xf32>
    %17 = math.rsqrt %16 : vector<1x128xf32>
    %18 = vector.broadcast %17 : vector<1x128xf32> to vector<256x128xf32>
    %19 = arith.mulf %9, %18 : vector<256x128xf32>
    %cst_9 = arith.constant 0.000000e+00 : f32
    %20 = vector.broadcast %cst_9 : f32 to vector<256x128xf32>
    %21 = arith.maximumf %19, %20 : vector<256x128xf32>
    %c0_10 = arith.constant 0 : index
    %c0_11 = arith.constant 0 : index
    %c0_12 = arith.constant 0 : index
    %22 = vector.load %arg3[%c0_10, %c0_11, %c0_12] : memref<1x256x128xf32, #tpu.memory_space<vmem>>, vector<1x256x128xf32>
    %23 = vector.shape_cast %22 : vector<1x256x128xf32> to vector<256x128xf32>
    %24 = vector.shape_cast %21 : vector<256x128xf32> to vector<1x256x128xf32>
    tpu.vector_store %arg3[%c0_10, %c0_11, %c0_12], %24 {strides = array<i32>} : memref<1x256x128xf32, #tpu.memory_space<vmem>>, vector<1x256x128xf32>,
    return
  }
  func.func @transform_0(%arg0: i32) -> (i32, i32, i32) {
    %c0_i32 = arith.constant 0 : i32
    %c0_i32_0 = arith.constant 0 : i32
    %c0_i32_1 = arith.constant 0 : i32
    return %arg0, %c0_i32, %c0_i32_0 : i32, i32, i32
  }
  func.func @transform_1(%arg0: i32) -> (i32, i32) {
    %c0_i32 = arith.constant 0 : i32
    %c0_i32_0 = arith.constant 0 : i32
    %c0_i32_1 = arith.constant 0 : i32
    return %c0_i32, %c0_i32_0 : i32, i32
  }
  func.func @transform_2(%arg0: i32) -> (i32, i32, i32) {
    %c0_i32 = arith.constant 0 : i32
    %c0_i32_0 = arith.constant 0 : i32
    %c0_i32_1 = arith.constant 0 : i32
    return %arg0, %c0_i32, %c0_i32_0 : i32, i32, i32
  }
}

</mosaic_0001>

<llo_original>
// kernel: conv_block_forward.1
$region0: #{conv_block_forward.1}
  #allocation0 [shape = 'u32[]', space=smem, size = 0x4, offset = 0x4, fixed_abs, tag = 'smem constant byte address 0x4 - core index']
  #allocation1 [shape = 'u32[144,128]{1,0:T(1,128)}', space=vmem, size = 0x12000, scoped, tag = 'internal scratch']
  %s0 = inlined_call_operand.vmem [shape: bf16[2,256,128], index: 0, kind: input, shape index: {}]
  %s1 = inlined_call_operand.vmem [shape: bf16[128,128], index: 1, kind: input, shape index: {}]
  %s2 = inlined_call_operand.hbm [shape: f32[2,256,128], index: 2, kind: output, shape index: {}]
  %s3 = sld [smem:[#allocation0]]
  $region41: #{conv_block_forward.1} parent=0
    _
  %s5 = ssub.s32 1, %s3
  %s6 = scalar_select 0, %s5, %s3
  $region1: #{conv_block_forward.1} parent=0
    #allocation2 [shape = 'u8[262144]{0}', space=vmem, size = 0x40000, scoped, tag = 'output window, operand 0']
    #allocation3 [shape = 's32[2]{0}', space=sflag, size = 0x8, scoped, tag = 'scoped memory for conv_block_forward.1']
    %7 = vsyncpa [#allocation3], 0
    %s8 = scalar_lea.sflag [#allocation3], 1
    %9 = vsyncpa %s8, 0
    loop: start=0, step=1, limit=4
    $region2: #{conv_block_forward.1} parent=1 // loop_pre_header
      _
    $region3: #{conv_block_forward.1} parent=1 // loop_header
      %s11 = sphi 0, %s15
      %p12 = scmp.ge.s32.totalorder %s11, 4
      %s21 = sphi 0, %s23
      %s24 = sphi 0, %s21
      %s25 = sphi 0, %s24
      %s41 = sphi 0, %s25
      %s45 = sphi 0, %s45
      %s47 = sphi 0, %s45
      %s48 = sphi 0, %s47
      %s62 = sphi 0, %s48
      %s68 = sphi 0, %s70
      %s71 = sphi 0, %s68
      %s72 = sphi 0, %s71
      %s88 = sphi 0, %s72
    $region4: #{conv_block_forward.1} parent=1 // loop_header_branch
      %14 = sbr.rel (%p12) target = $region8
    $region5: #{conv_block_forward.1} parent=1 // loop_body
      %s16 = ssub.s32 %s11, 1
      %s17 = ssub.s32 %s11, 2
      %s18 = sadd.s32 %s11, 1
      %s19 = ssub.s32 %s11, %s18
      %p20 = scmp.eq.s32.totalorder %s19, 0
      %s22 = sadd.s32 %s21, 1
      %s23 = scalar_select %p20, %s21, %s22
      %p26 = pneg %p20
      %p27 = scmp.eq.s32.totalorder %s11, 1
      %p28 = por %p26, %p27
      %p29 = scmp.ne.s32.totalorder %s21, %s24
      %p30 = scmp.eq.s32.totalorder %s11, 0
      %p31 = por %p29, %p30
      %p32 = scmp.ne.s32.totalorder %s21, %s24
      %p33 = scmp.eq.s32.totalorder %s16, 1
      %p34 = por %p32, %p33
      %p35 = scmp.ne.s32.totalorder %s24, %s25
      %p36 = scmp.eq.s32.totalorder %s16, 0
      %p37 = por %p35, %p36
      %p38 = scmp.ne.s32.totalorder %s24, %s25
      %p39 = scmp.eq.s32.totalorder %s17, 1
      %p40 = por %p38, %p39
      %p42 = scmp.ne.s32.totalorder %s25, %s41
      %p43 = scmp.eq.s32.totalorder %s17, 0
      %p44 = por %p42, %p43
      %s46 = sadd.s32 %s45, 1
      %p49 = scmp.eq.s32.totalorder %s11, 1
      %p50 = scmp.ne.s32.totalorder %s45, %s47
      %p51 = scmp.eq.s32.totalorder %s11, 0
      %p52 = por %p50, %p51
      %p53 = scmp.ne.s32.totalorder %s45, %s47
      %p54 = scmp.eq.s32.totalorder %s16, 1
      %p55 = por %p53, %p54
      %p56 = scmp.ne.s32.totalorder %s47, %s48
      %p57 = scmp.eq.s32.totalorder %s16, 0
      %p58 = por %p56, %p57
      %p59 = scmp.ne.s32.totalorder %s47, %s48
      %p60 = scmp.eq.s32.totalorder %s17, 1
      %p61 = por %p59, %p60
      %p63 = scmp.ne.s32.totalorder %s48, %s62
      %p64 = scmp.eq.s32.totalorder %s17, 0
      %p65 = por %p63, %p64
      %s66 = ssub.s32 %s11, %s18
      %p67 = scmp.eq.s32.totalorder %s66, 0
      %s69 = sadd.s32 %s68, 1
      %s70 = scalar_select %p67, %s68, %s69
      %p73 = pneg %p67
      %p74 = scmp.eq.s32.totalorder %s11, 1
      %p75 = por %p73, %p74
      %p76 = scmp.ne.s32.totalorder %s68, %s71
      %p77 = scmp.eq.s32.totalorder %s11, 0
      %p78 = por %p76, %p77
      %p79 = scmp.ne.s32.totalorder %s68, %s71
      %p80 = scmp.eq.s32.totalorder %s16, 1
      %p81 = por %p79, %p80
      %p82 = scmp.ne.s32.totalorder %s71, %s72
      %p83 = scmp.eq.s32.totalorder %s16, 0
      %p84 = por %p82, %p83
      %p85 = scmp.ne.s32.totalorder %s71, %s72
      %p86 = scmp.eq.s32.totalorder %s17, 1
      %p87 = por %p85, %p86
      %p89 = scmp.ne.s32.totalorder %s72, %s88
      %p90 = scmp.eq.s32.totalorder %s17, 0
      %p91 = por %p89, %p90
      %p92 = scmp.le.s32.totalorder 1, %s11
      %p93 = scmp.lt.s32.totalorder %s11, 3
      %p94 = pnand %p92, %p93
      %p95 = pneg %p94
      // Predicated region
      $region9: #{conv_block_forward.1} parent=5 // pred_check
        _
      $region10: #{conv_block_forward.1} parent=5 // pred_check_branch
        %97 = sbr.rel (%p94) target = $region12
      $region11: #{conv_block_forward.1} parent=5 // pred_region
        %s98 = ssub.s32 %s11, 1
        // Predicated region
        $region13: #{conv_block_forward.1} parent=11 // pred_check
          %p99 = pneg %p58
        $region14: #{conv_block_forward.1} parent=11 // pred_check_branch
          %101 = sbr.rel (%p99) target = $region16
        $region15: #{conv_block_forward.1} parent=11 // pred_region
          _
        $region16: #{conv_block_forward.1} parent=11 // pred_fallthru
          _
      $region12: #{conv_block_forward.1} parent=5 // pred_fallthru
        _
      %p102 = scmp.lt.s32.totalorder %s11, 2
      // Predicated region
      $region17: #{conv_block_forward.1} parent=5 // pred_check
        %p103 = pneg %p102
      $region18: #{conv_block_forward.1} parent=5 // pred_check_branch
        %105 = sbr.rel (%p103) target = $region20
      $region19: #{conv_block_forward.1} parent=5 // pred_region
        // Predicated region
        $region21: #{conv_block_forward.1} parent=19 // pred_check
          %p106 = pneg %p31
        $region22: #{conv_block_forward.1} parent=19 // pred_check_branch
          %108 = sbr.rel (%p106) target = $region24
        $region23: #{conv_block_forward.1} parent=19 // pred_region
          %p109 = scmp.lt.s32.totalorder %s11, 1
          %s110 = scalar_select %p109, %s11, 1
          %s111 = smul.addr %s110, 32
          %s112 = smul.addr %s111, 4
          %s113 = scalar_lea.vmem %s0, %s112
        $region24: #{conv_block_forward.1} parent=19 // pred_fallthru
          _
      $region20: #{conv_block_forward.1} parent=5 // pred_fallthru
        _
      %p114 = scmp.le.s32.totalorder 1, %s11
      %p115 = scmp.lt.s32.totalorder %s11, 3
      %p116 = pnand %p114, %p115
      %p117 = pneg %p116
      // Predicated region
      $region25: #{conv_block_forward.1} parent=5 // pred_check
        _
      $region26: #{conv_block_forward.1} parent=5 // pred_check_branch
        %119 = sbr.rel (%p116) target = $region28
      $region27: #{conv_block_forward.1} parent=5 // pred_region
        %s120 = ssub.s32 %s11, 1
        %p121 = scmp.lt.s32.totalorder %s16, 1
        %s122 = scalar_select %p121, %s16, 1
        %s123 = smul.addr %s122, 32
        %s124 = smul.addr %s123, 4
        %s125 = scalar_lea.vmem %s0, %s124
        %p126 = pneg %p37
        %p127 = pneg %p34
        %p128 = pneg %p58
        %p129 = pneg %p55
        %p130 = pneg %p84
        %p131 = pneg %p81
        %s132 = sand.u32 %s71, 1
        %s133 = scalar_lea.sflag [#allocation3], %s132
        %s134 = sand.u32 %s71, 1
        %s135 = smul.addr %s134, 256
        %s136 = scalar_lea.vmem [#allocation2], %s135
        %p137 = scmp.lt.s32.totalorder %s16, 1
        %s138 = scalar_select %p137, %s16, 1
        %s139 = smul.addr %s138, 32
        %s140 = smul.addr %s139, 4
        %s141 = scalar_lea.vmem %s0, %s140
        %v143 = vld [vmem:[%s141] sm:$0xf]
        %v144 = vld [vmem:[%s141 + $0x4] sm:$0xf]
        %v145 = vld [vmem:[%s141 + $0x8] sm:$0xf]
        %v146 = vld [vmem:[%s141 + $0xc] sm:$0xf]
        %v147 = vld [vmem:[%s141 + $0x10] sm:$0xf]
        %v148 = vld [vmem:[%s141 + $0x14] sm:$0xf]
        %v149 = vld [vmem:[%s141 + $0x18] sm:$0xf]
        %v150 = vld [vmem:[%s141 + $0x1c] sm:$0xf]
        %v151 = vld [vmem:[%s141 + $0x20] sm:$0xf]
        %v152 = vld [vmem:[%s141 + $0x24] sm:$0xf]
        %v153 = vld [vmem:[%s141 + $0x28] sm:$0xf]
        %v154 = vld [vmem:[%s141 + $0x2c] sm:$0xf]
        %v155 = vld [vmem:[%s141 + $0x30] sm:$0xf]
        %v156 = vld [vmem:[%s141 + $0x34] sm:$0xf]
        %v157 = vld [vmem:[%s141 + $0x38] sm:$0xf]
        %v158 = vld [vmem:[%s141 + $0x3c] sm:$0xf]
        %v159 = vld [vmem:[%s141 + $0x40] sm:$0xf]
        %v160 = vld [vmem:[%s141 + $0x44] sm:$0xf]
        %v161 = vld [vmem:[%s141 + $0x48] sm:$0xf]
        %v162 = vld [vmem:[%s141 + $0x4c] sm:$0xf]
        %v163 = vld [vmem:[%s141 + $0x50] sm:$0xf]
        %v164 = vld [vmem:[%s141 + $0x54] sm:$0xf]
        %v165 = vld [vmem:[%s141 + $0x58] sm:$0xf]
        %v166 = vld [vmem:[%s141 + $0x5c] sm:$0xf]
        %v167 = vld [vmem:[%s141 + $0x60] sm:$0xf]
        %v168 = vld [vmem:[%s141 + $0x64] sm:$0xf]
        %v169 = vld [vmem:[%s141 + $0x68] sm:$0xf]
        %v170 = vld [vmem:[%s141 + $0x6c] sm:$0xf]
        %v171 = vld [vmem:[%s141 + $0x70] sm:$0xf]
        %v172 = vld [vmem:[%s141 + $0x74] sm:$0xf]
        %v173 = vld [vmem:[%s141 + $0x78] sm:$0xf]
        %v174 = vld [vmem:[%s141 + $0x7c] sm:$0xf]
        %v175 = vld [vmem:[%s1] sm:$0xf]
        %v176 = vld [vmem:[%s1 + $0x4] sm:$0xf]
        %v177 = vld [vmem:[%s1 + $0x8] sm:$0xf]
        %v178 = vld [vmem:[%s1 + $0xc] sm:$0xf]
        %v179 = vld [vmem:[%s1 + $0x10] sm:$0xf]
        %v180 = vld [vmem:[%s1 + $0x14] sm:$0xf]
        %v181 = vld [vmem:[%s1 + $0x18] sm:$0xf]
        %v182 = vld [vmem:[%s1 + $0x1c] sm:$0xf]
        %v183 = vld [vmem:[%s1 + $0x20] sm:$0xf]
        %v184 = vld [vmem:[%s1 + $0x24] sm:$0xf]
        %v185 = vld [vmem:[%s1 + $0x28] sm:$0xf]
        %v186 = vld [vmem:[%s1 + $0x2c] sm:$0xf]
        %v187 = vld [vmem:[%s1 + $0x30] sm:$0xf]
        %v188 = vld [vmem:[%s1 + $0x34] sm:$0xf]
        %v189 = vld [vmem:[%s1 + $0x38] sm:$0xf]
        %v190 = vld [vmem:[%s1 + $0x3c] sm:$0xf]
        %v223 = vunpack.c.l.b16 %v143
        %v224 = vunpack.c.l.b16 %v144
        %v225 = vunpack.c.l.b16 %v145
        %v226 = vunpack.c.l.b16 %v146
        %v227 = vunpack.c.l.b16 %v147
        %v228 = vunpack.c.l.b16 %v148
        %v229 = vunpack.c.l.b16 %v149
        %v230 = vunpack.c.l.b16 %v150
        %v231 = vunpack.c.l.b16 %v151
        %v232 = vunpack.c.l.b16 %v152
        %v233 = vunpack.c.l.b16 %v153
        %v234 = vunpack.c.l.b16 %v154
        %v235 = vunpack.c.l.b16 %v155
        %v236 = vunpack.c.l.b16 %v156
        %v237 = vunpack.c.l.b16 %v157
        %v238 = vunpack.c.l.b16 %v158
        %v239 = vunpack.c.l.b16 %v159
        %v240 = vunpack.c.l.b16 %v160
        %v241 = vunpack.c.l.b16 %v161
        %v242 = vunpack.c.l.b16 %v162
        %v243 = vunpack.c.l.b16 %v163
        %v244 = vunpack.c.l.b16 %v164
        %v245 = vunpack.c.l.b16 %v165
        %v246 = vunpack.c.l.b16 %v166
        %v247 = vunpack.c.l.b16 %v167
        %v248 = vunpack.c.l.b16 %v168
        %v249 = vunpack.c.l.b16 %v169
        %v250 = vunpack.c.l.b16 %v170
        %v251 = vunpack.c.l.b16 %v171
        %v252 = vunpack.c.l.b16 %v172
        %v253 = vunpack.c.l.b16 %v173
        %v254 = vunpack.c.l.b16 %v174
        %v255 = vpack.c.b16 %v224, %v223
        %v256 = vpack.c.b16 %v226, %v225
        %v257 = vpack.c.b16 %v228, %v227
        %v258 = vpack.c.b16 %v230, %v229
        %v259 = vpack.c.b16 %v232, %v231
        %v260 = vpack.c.b16 %v234, %v233
        %v261 = vpack.c.b16 %v236, %v235
        %v262 = vpack.c.b16 %v238, %v237
        %v263 = vpack.c.b16 %v240, %v239
        %v264 = vpack.c.b16 %v242, %v241
        %v265 = vpack.c.b16 %v244, %v243
        %v266 = vpack.c.b16 %v246, %v245
        %v267 = vpack.c.b16 %v248, %v247
        %v268 = vpack.c.b16 %v250, %v249
        %v269 = vpack.c.b16 %v252, %v251
        %v270 = vpack.c.b16 %v254, %v253
        %v303 = vunpack.c.l.b16 %v175
        %v304 = vunpack.c.l.b16 %v176
        %v305 = vunpack.c.l.b16 %v177
        %v306 = vunpack.c.l.b16 %v178
        %v307 = vunpack.c.l.b16 %v179
        %v308 = vunpack.c.l.b16 %v180
        %v309 = vunpack.c.l.b16 %v181
        %v310 = vunpack.c.l.b16 %v182
        %v311 = vunpack.c.l.b16 %v183
        %v312 = vunpack.c.l.b16 %v184
        %v313 = vunpack.c.l.b16 %v185
        %v314 = vunpack.c.l.b16 %v186
        %v315 = vunpack.c.l.b16 %v187
        %v316 = vunpack.c.l.b16 %v188
        %v317 = vunpack.c.l.b16 %v189
        %v318 = vunpack.c.l.b16 %v190
        %v319 = vpack.c.b16 %v304, %v303
        %v320 = vpack.c.b16 %v306, %v305
        %v321 = vpack.c.b16 %v308, %v307
        %v322 = vpack.c.b16 %v310, %v309
        %v323 = vpack.c.b16 %v312, %v311
        %v324 = vpack.c.b16 %v314, %v313
        %v325 = vpack.c.b16 %v316, %v315
        %v326 = vpack.c.b16 %v318, %v317
        %335 = vmatprep.subr.bf16.mxu0 0
        %336 = vmatpush1.bf16.msra.mxu0 %v326
        %337 = vmatprep.subr.bf16.mxu0 0
        %338 = vmatpush1.bf16.msra.mxu0 %v325
        %339 = vmatprep.subr.bf16.mxu0 0
        %340 = vmatpush1.bf16.msra.mxu0 %v324
        %341 = vmatprep.subr.bf16.mxu0 0
        %342 = vmatpush1.bf16.msra.mxu0 %v323
        %343 = vmatprep.subr.bf16.mxu0 0
        %344 = vmatpush1.bf16.msra.mxu0 %v322
        %345 = vmatprep.subr.bf16.mxu0 0
        %346 = vmatpush1.bf16.msra.mxu0 %v321
        %347 = vmatprep.subr.bf16.mxu0 0
        %348 = vmatpush1.bf16.msra.mxu0 %v320
        %349 = vmatprep.subr.bf16.mxu0 0
        %350 = vmatpush1.bf16.msra.mxu0 %v319
        %351 = vmatprep.subr.bf16.mxu0 0
        %352 = vmatpush2.bf16.msra.mxu0 0
        %353 = vmatprep.subr.bf16.mxu0 0
        %354 = vmatpush2.bf16.msra.mxu0 0
        %355 = vmatprep.subr.bf16.mxu0 0
        %356 = vmatpush2.bf16.msra.mxu0 0
        %357 = vmatprep.subr.bf16.mxu0 0
        %358 = vmatpush2.bf16.msra.mxu0 0
        %359 = vmatprep.subr.bf16.mxu0 0
        %360 = vmatpush2.bf16.msra.mxu0 0
        %361 = vmatprep.subr.bf16.mxu0 0
        %362 = vmatpush2.bf16.msra.mxu0 0
        %363 = vmatprep.subr.bf16.mxu0 0
        %364 = vmatpush2.bf16.msra.mxu0 0
        %365 = vmatprep.subr.bf16.mxu0 0
        %366 = vmatpush2.bf16.msra.mxu0 0
        %367 = vmatprep.mubr.bf16.mxu0 0
        %368 = vmatmul.mubr.bf16.gmra.mxu0 %v255
        %v369 = vpop.f32.mrf.mxu0
        %v370 = vadd.f32 0.0, %v369
        %v371 = vpop.f32.mrf.mxu0
        %v372 = vpop.f32.mrf.mxu0
        %v373 = vadd.f32 0.0, %v372
        %v374 = vpop.f32.mrf.mxu0
        %375 = vmatprep.mubr.bf16.mxu0 0
        %376 = vmatmul.mubr.bf16.gmra.mxu0 %v256
        %v377 = vpop.f32.mrf.mxu0
        %v378 = vadd.f32 0.0, %v377
        %v379 = vpop.f32.mrf.mxu0
        %v380 = vpop.f32.mrf.mxu0
        %v381 = vadd.f32 0.0, %v380
        %v382 = vpop.f32.mrf.mxu0
        %383 = vmatprep.mubr.bf16.mxu0 0
        %384 = vmatmul.mubr.bf16.gmra.mxu0 %v257
        %v385 = vpop.f32.mrf.mxu0
        %v386 = vadd.f32 0.0, %v385
        %v387 = vpop.f32.mrf.mxu0
        %v388 = vpop.f32.mrf.mxu0
        %v389 = vadd.f32 0.0, %v388
        %v390 = vpop.f32.mrf.mxu0
        %391 = vmatprep.mubr.bf16.mxu0 0
        %392 = vmatmul.mubr.bf16.gmra.mxu0 %v258
        %v393 = vpop.f32.mrf.mxu0
        %v394 = vadd.f32 0.0, %v393
        %v395 = vpop.f32.mrf.mxu0
        %v396 = vpop.f32.mrf.mxu0
        %v397 = vadd.f32 0.0, %v396
        %v398 = vpop.f32.mrf.mxu0
        %399 = vmatprep.mubr.bf16.mxu0 0
        %400 = vmatmul.mubr.bf16.gmra.mxu0 %v259
        %v401 = vpop.f32.mrf.mxu0
        %v402 = vadd.f32 0.0, %v401
        %v403 = vpop.f32.mrf.mxu0
        %v404 = vpop.f32.mrf.mxu0
        %v405 = vadd.f32 0.0, %v404
        %v406 = vpop.f32.mrf.mxu0
        %407 = vmatprep.mubr.bf16.mxu0 0
        %408 = vmatmul.mubr.bf16.gmra.mxu0 %v260
        %v409 = vpop.f32.mrf.mxu0
        %v410 = vadd.f32 0.0, %v409
        %v411 = vpop.f32.mrf.mxu0
        %v412 = vpop.f32.mrf.mxu0
        %v413 = vadd.f32 0.0, %v412
        %v414 = vpop.f32.mrf.mxu0
        %415 = vmatprep.mubr.bf16.mxu0 0
        %416 = vmatmul.mubr.bf16.gmra.mxu0 %v261
        %v417 = vpop.f32.mrf.mxu0
        %v418 = vadd.f32 0.0, %v417
        %v419 = vpop.f32.mrf.mxu0
        %v420 = vpop.f32.mrf.mxu0
        %v421 = vadd.f32 0.0, %v420
        %v422 = vpop.f32.mrf.mxu0
        %423 = vmatprep.mubr.bf16.mxu0 0
        %424 = vmatmul.mubr.bf16.gmra.mxu0 %v262
        %v425 = vpop.f32.mrf.mxu0
        %v426 = vadd.f32 0.0, %v425
        %v427 = vpop.f32.mrf.mxu0
        %v428 = vpop.f32.mrf.mxu0
        %v429 = vadd.f32 0.0, %v428
        %v430 = vpop.f32.mrf.mxu0
        %431 = vmatprep.mubr.bf16.mxu0 0
        %432 = vmatmul.mubr.bf16.gmra.mxu0 %v263
        %v433 = vpop.f32.mrf.mxu0
        %v434 = vadd.f32 0.0, %v433
        %v435 = vpop.f32.mrf.mxu0
        %v436 = vpop.f32.mrf.mxu0
        %v437 = vadd.f32 0.0, %v436
        %v438 = vpop.f32.mrf.mxu0
        %439 = vmatprep.mubr.bf16.mxu0 0
        %440 = vmatmul.mubr.bf16.gmra.mxu0 %v264
        %v441 = vpop.f32.mrf.mxu0
        %v442 = vadd.f32 0.0, %v441
        %v443 = vpop.f32.mrf.mxu0
        %v444 = vpop.f32.mrf.mxu0
        %v445 = vadd.f32 0.0, %v444
        %v446 = vpop.f32.mrf.mxu0
        %447 = vmatprep.mubr.bf16.mxu0 0
        %448 = vmatmul.mubr.bf16.gmra.mxu0 %v265
        %v449 = vpop.f32.mrf.mxu0
        %v450 = vadd.f32 0.0, %v449
        %v451 = vpop.f32.mrf.mxu0
        %v452 = vpop.f32.mrf.mxu0
        %v453 = vadd.f32 0.0, %v452
        %v454 = vpop.f32.mrf.mxu0
        %455 = vmatprep.mubr.bf16.mxu0 0
        %456 = vmatmul.mubr.bf16.gmra.mxu0 %v266
        %v457 = vpop.f32.mrf.mxu0
        %v458 = vadd.f32 0.0, %v457
        %v459 = vpop.f32.mrf.mxu0
        %v460 = vpop.f32.mrf.mxu0
        %v461 = vadd.f32 0.0, %v460
        %v462 = vpop.f32.mrf.mxu0
        %463 = vmatprep.mubr.bf16.mxu0 0
        %464 = vmatmul.mubr.bf16.gmra.mxu0 %v267
        %v465 = vpop.f32.mrf.mxu0
        %v466 = vadd.f32 0.0, %v465
        %v467 = vpop.f32.mrf.mxu0
        %v468 = vpop.f32.mrf.mxu0
        %v469 = vadd.f32 0.0, %v468
        %v470 = vpop.f32.mrf.mxu0
        %471 = vmatprep.mubr.bf16.mxu0 0
        %472 = vmatmul.mubr.bf16.gmra.mxu0 %v268
        %v473 = vpop.f32.mrf.mxu0
        %v474 = vadd.f32 0.0, %v473
        %v475 = vpop.f32.mrf.mxu0
        %v476 = vpop.f32.mrf.mxu0
        %v477 = vadd.f32 0.0, %v476
        %v478 = vpop.f32.mrf.mxu0
        %479 = vmatprep.mubr.bf16.mxu0 0
        %480 = vmatmul.mubr.bf16.gmra.mxu0 %v269
        %v481 = vpop.f32.mrf.mxu0
        %v482 = vadd.f32 0.0, %v481
        %v483 = vpop.f32.mrf.mxu0
        %v484 = vpop.f32.mrf.mxu0
        %v485 = vadd.f32 0.0, %v484
        %v486 = vpop.f32.mrf.mxu0
        %487 = vmatprep.mubr.bf16.mxu0 0
        %488 = vmatmul.mubr.bf16.gmra.mxu0 %v270
        %v489 = vpop.f32.mrf.mxu0
        %v490 = vadd.f32 0.0, %v489
        %v491 = vpop.f32.mrf.mxu0
        %v492 = vpop.f32.mrf.mxu0
        %v493 = vadd.f32 0.0, %v492
        %v494 = vpop.f32.mrf.mxu0
        %495 = vdwg.mxu0
        %v496 = vadd.f32 %v370, %v373
        %v497 = vadd.f32 %v496, %v378
        %v498 = vadd.f32 %v497, %v381
        %v499 = vadd.f32 %v498, %v386
        %v500 = vadd.f32 %v499, %v389
        %v501 = vadd.f32 %v500, %v394
        %v502 = vadd.f32 %v501, %v397
        %v503 = vadd.f32 %v502, %v402
        %v504 = vadd.f32 %v503, %v405
        %v505 = vadd.f32 %v504, %v410
        %v506 = vadd.f32 %v505, %v413
        %v507 = vadd.f32 %v506, %v418
        %v508 = vadd.f32 %v507, %v421
        %v509 = vadd.f32 %v508, %v426
        %v510 = vadd.f32 %v509, %v429
        %v511 = vadd.f32 %v510, %v434
        %v512 = vadd.f32 %v511, %v437
        %v513 = vadd.f32 %v512, %v442
        %v514 = vadd.f32 %v513, %v445
        %v515 = vadd.f32 %v514, %v450
        %v516 = vadd.f32 %v515, %v453
        %v517 = vadd.f32 %v516, %v458
        %v518 = vadd.f32 %v517, %v461
        %v519 = vadd.f32 %v518, %v466
        %v520 = vadd.f32 %v519, %v469
        %v521 = vadd.f32 %v520, %v474
        %v522 = vadd.f32 %v521, %v477
        %v523 = vadd.f32 %v522, %v482
        %v524 = vadd.f32 %v523, %v485
        %v525 = vadd.f32 %v524, %v490
        %v526 = vadd.f32 %v525, %v493
        %v527 = vrot.slane %v526, 4
        %v528 = vadd.f32 %v526, %v527
        %v529 = vrot.slane %v528, 2
        %v530 = vadd.f32 %v528, %v529
        %v531 = vrot.slane %v530, 1
        %v532 = vadd.f32 %v530, %v531
        %v533 = vrcp.pop 256.0
        %v534 = vmul.f32 %v532, %v533
        %v535 = vsub.f32 %v370, %v534
        %v536 = vsub.f32 %v373, %v534
        %v537 = vsub.f32 %v378, %v534
        %v538 = vsub.f32 %v381, %v534
        %v539 = vsub.f32 %v386, %v534
        %v540 = vsub.f32 %v389, %v534
        %v541 = vsub.f32 %v394, %v534
        %v542 = vsub.f32 %v397, %v534
        %v543 = vsub.f32 %v402, %v534
        %v544 = vsub.f32 %v405, %v534
        %v545 = vsub.f32 %v410, %v534
        %v546 = vsub.f32 %v413, %v534
        %v547 = vsub.f32 %v418, %v534
        %v548 = vsub.f32 %v421, %v534
        %v549 = vsub.f32 %v426, %v534
        %v550 = vsub.f32 %v429, %v534
        %v551 = vsub.f32 %v434, %v534
        %v552 = vsub.f32 %v437, %v534
        %v553 = vsub.f32 %v442, %v534
        %v554 = vsub.f32 %v445, %v534
        %v555 = vsub.f32 %v450, %v534
        %v556 = vsub.f32 %v453, %v534
        %v557 = vsub.f32 %v458, %v534
        %v558 = vsub.f32 %v461, %v534
        %v559 = vsub.f32 %v466, %v534
        %v560 = vsub.f32 %v469, %v534
        %v561 = vsub.f32 %v474, %v534
        %v562 = vsub.f32 %v477, %v534
        %v563 = vsub.f32 %v482, %v534
        %v564 = vsub.f32 %v485, %v534
        %v565 = vsub.f32 %v490, %v534
        %v566 = vsub.f32 %v493, %v534
        %v567 = vmul.f32 %v535, %v535
        %v568 = vmul.f32 %v536, %v536
        %v569 = vmul.f32 %v537, %v537
        %v570 = vmul.f32 %v538, %v538
        %v571 = vmul.f32 %v539, %v539
        %v572 = vmul.f32 %v540, %v540
        %v573 = vmul.f32 %v541, %v541
        %v574 = vmul.f32 %v542, %v542
        %v575 = vmul.f32 %v543, %v543
        %v576 = vmul.f32 %v544, %v544
        %v577 = vmul.f32 %v545, %v545
        %v578 = vmul.f32 %v546, %v546
        %v579 = vmul.f32 %v547, %v547
        %v580 = vmul.f32 %v548, %v548
        %v581 = vmul.f32 %v549, %v549
        %v582 = vmul.f32 %v550, %v550
        %v583 = vmul.f32 %v551, %v551
        %v584 = vmul.f32 %v552, %v552
        %v585 = vmul.f32 %v553, %v553
        %v586 = vmul.f32 %v554, %v554
        %v587 = vmul.f32 %v555, %v555
        %v588 = vmul.f32 %v556, %v556
        %v589 = vmul.f32 %v557, %v557
        %v590 = vmul.f32 %v558, %v558
        %v591 = vmul.f32 %v559, %v559
        %v592 = vmul.f32 %v560, %v560
        %v593 = vmul.f32 %v561, %v561
        %v594 = vmul.f32 %v562, %v562
        %v595 = vmul.f32 %v563, %v563
        %v596 = vmul.f32 %v564, %v564
        %v597 = vmul.f32 %v565, %v565
        %v598 = vmul.f32 %v566, %v566
        %v599 = vadd.f32 %v567, %v568
        %v600 = vadd.f32 %v599, %v569
        %v601 = vadd.f32 %v600, %v570
        %v602 = vadd.f32 %v601, %v571
        %v603 = vadd.f32 %v602, %v572
        %v604 = vadd.f32 %v603, %v573
        %v605 = vadd.f32 %v604, %v574
        %v606 = vadd.f32 %v605, %v575
        %v607 = vadd.f32 %v606, %v576
        %v608 = vadd.f32 %v607, %v577
        %v609 = vadd.f32 %v608, %v578
        %v610 = vadd.f32 %v609, %v579
        %v611 = vadd.f32 %v610, %v580
        %v612 = vadd.f32 %v611, %v581
        %v613 = vadd.f32 %v612, %v582
        %v614 = vadd.f32 %v613, %v583
        %v615 = vadd.f32 %v614, %v584
        %v616 = vadd.f32 %v615, %v585
        %v617 = vadd.f32 %v616, %v586
        %v618 = vadd.f32 %v617, %v587
        %v619 = vadd.f32 %v618, %v588
        %v620 = vadd.f32 %v619, %v589
        %v621 = vadd.f32 %v620, %v590
        %v622 = vadd.f32 %v621, %v591
        %v623 = vadd.f32 %v622, %v592
        %v624 = vadd.f32 %v623, %v593
        %v625 = vadd.f32 %v624, %v594
        %v626 = vadd.f32 %v625, %v595
        %v627 = vadd.f32 %v626, %v596
        %v628 = vadd.f32 %v627, %v597
        %v629 = vadd.f32 %v628, %v598
        %v630 = vrot.slane %v629, 4
        %v631 = vadd.f32 %v629, %v630
        %v632 = vrot.slane %v631, 2
        %v633 = vadd.f32 %v631, %v632
        %v634 = vrot.slane %v633, 1
        %v635 = vadd.f32 %v633, %v634
        %v636 = vmul.f32 %v635, %v533
        %v637 = vadd.f32 %v636, 1e-05
        %v638 = vrsqrt.pop %v637
        %v639 = vmul.f32 %v535, %v638
        %v640 = vmul.f32 %v536, %v638
        %v641 = vmul.f32 %v537, %v638
        %v642 = vmul.f32 %v538, %v638
        %v643 = vmul.f32 %v539, %v638
        %v644 = vmul.f32 %v540, %v638
        %v645 = vmul.f32 %v541, %v638
        %v646 = vmul.f32 %v542, %v638
        %v647 = vmul.f32 %v543, %v638
        %v648 = vmul.f32 %v544, %v638
        %v649 = vmul.f32 %v545, %v638
        %v650 = vmul.f32 %v546, %v638
        %v651 = vmul.f32 %v547, %v638
        %v652 = vmul.f32 %v548, %v638
        %v653 = vmul.f32 %v549, %v638
        %v654 = vmul.f32 %v550, %v638
        %v655 = vmul.f32 %v551, %v638
        %v656 = vmul.f32 %v552, %v638
        %v657 = vmul.f32 %v553, %v638
        %v658 = vmul.f32 %v554, %v638
        %v659 = vmul.f32 %v555, %v638
        %v660 = vmul.f32 %v556, %v638
        %v661 = vmul.f32 %v557, %v638
        %v662 = vmul.f32 %v558, %v638
        %v663 = vmul.f32 %v559, %v638
        %v664 = vmul.f32 %v560, %v638
        %v665 = vmul.f32 %v561, %v638
        %v666 = vmul.f32 %v562, %v638
        %v667 = vmul.f32 %v563, %v638
        %v668 = vmul.f32 %v564, %v638
        %v669 = vmul.f32 %v565, %v638
        %v670 = vmul.f32 %v566, %v638
        %v671 = vmax.f32 %v639, 0.0
        %v672 = vmax.f32 %v640, 0.0
        %v673 = vmax.f32 %v641, 0.0
        %v674 = vmax.f32 %v642, 0.0
        %v675 = vmax.f32 %v643, 0.0
        %v676 = vmax.f32 %v644, 0.0
        %v677 = vmax.f32 %v645, 0.0
        %v678 = vmax.f32 %v646, 0.0
        %v679 = vmax.f32 %v647, 0.0
        %v680 = vmax.f32 %v648, 0.0
        %v681 = vmax.f32 %v649, 0.0
        %v682 = vmax.f32 %v650, 0.0
        %v683 = vmax.f32 %v651, 0.0
        %v684 = vmax.f32 %v652, 0.0
        %v685 = vmax.f32 %v653, 0.0
        %v686 = vmax.f32 %v654, 0.0
        %v687 = vmax.f32 %v655, 0.0
        %v688 = vmax.f32 %v656, 0.0
        %v689 = vmax.f32 %v657, 0.0
        %v690 = vmax.f32 %v658, 0.0
        %v691 = vmax.f32 %v659, 0.0
        %v692 = vmax.f32 %v660, 0.0
        %v693 = vmax.f32 %v661, 0.0
        %v694 = vmax.f32 %v662, 0.0
        %v695 = vmax.f32 %v663, 0.0
        %v696 = vmax.f32 %v664, 0.0
        %v697 = vmax.f32 %v665, 0.0
        %v698 = vmax.f32 %v666, 0.0
        %v699 = vmax.f32 %v667, 0.0
        %v700 = vmax.f32 %v668, 0.0
        %v701 = vmax.f32 %v669, 0.0
        %v702 = vmax.f32 %v670, 0.0
        %703 = vst [vmem:[%s136] sm:$0xff] %v671
        %704 = vst [vmem:[%s136 + $0x8] sm:$0xff] %v672
        %705 = vst [vmem:[%s136 + $0x10] sm:$0xff] %v673
        %706 = vst [vmem:[%s136 + $0x18] sm:$0xff] %v674
        %707 = vst [vmem:[%s136 + $0x20] sm:$0xff] %v675
        %708 = vst [vmem:[%s136 + $0x28] sm:$0xff] %v676
        %709 = vst [vmem:[%s136 + $0x30] sm:$0xff] %v677
        %710 = vst [vmem:[%s136 + $0x38] sm:$0xff] %v678
        %711 = vst [vmem:[%s136 + $0x40] sm:$0xff] %v679
        %712 = vst [vmem:[%s136 + $0x48] sm:$0xff] %v680
        %713 = vst [vmem:[%s136 + $0x50] sm:$0xff] %v681
        %714 = vst [vmem:[%s136 + $0x58] sm:$0xff] %v682
        %715 = vst [vmem:[%s136 + $0x60] sm:$0xff] %v683
        %716 = vst [vmem:[%s136 + $0x68] sm:$0xff] %v684
        %717 = vst [vmem:[%s136 + $0x70] sm:$0xff] %v685
        %718 = vst [vmem:[%s136 + $0x78] sm:$0xff] %v686
        %719 = vst [vmem:[%s136 + $0x80] sm:$0xff] %v687
        %720 = vst [vmem:[%s136 + $0x88] sm:$0xff] %v688
        %721 = vst [vmem:[%s136 + $0x90] sm:$0xff] %v689
        %722 = vst [vmem:[%s136 + $0x98] sm:$0xff] %v690
        %723 = vst [vmem:[%s136 + $0xa0] sm:$0xff] %v691
        %724 = vst [vmem:[%s136 + $0xa8] sm:$0xff] %v692
        %725 = vst [vmem:[%s136 + $0xb0] sm:$0xff] %v693
        %726 = vst [vmem:[%s136 + $0xb8] sm:$0xff] %v694
        %727 = vst [vmem:[%s136 + $0xc0] sm:$0xff] %v695
        %728 = vst [vmem:[%s136 + $0xc8] sm:$0xff] %v696
        %729 = vst [vmem:[%s136 + $0xd0] sm:$0xff] %v697
        %730 = vst [vmem:[%s136 + $0xd8] sm:$0xff] %v698
        %731 = vst [vmem:[%s136 + $0xe0] sm:$0xff] %v699
        %732 = vst [vmem:[%s136 + $0xe8] sm:$0xff] %v700
        %733 = vst [vmem:[%s136 + $0xf0] sm:$0xff] %v701
        %734 = vst [vmem:[%s136 + $0xf8] sm:$0xff] %v702
        %s735 = sand.u32 %s71, 1
        %s736 = scalar_lea.sflag [#allocation3], %s735
        %s737 = sand.u32 %s71, 1
        %s738 = smul.addr %s737, 256
        %s739 = scalar_lea.vmem [#allocation2], %s738
        // Predicated region
        $region29: #{conv_block_forward.1} parent=27 // pred_check
          %p740 = pneg %p81
        $region30: #{conv_block_forward.1} parent=27 // pred_check_branch
          %742 = sbr.rel (%p740) target = $region32
        $region31: #{conv_block_forward.1} parent=27 // pred_region
          %s744 = ssub.s32 4096, 4096
          %745 = vsyncadd %s736, %s744
          %s746 = smul.addr %s16, 32
          %s747 = smul.addr %s746, 128
          %s748 = scalar_lea.hbm %s2, %s747
          %s749 = sshll.u32 %s739, 4
          %s750 = int_to_ptr.vmem [resolvable:$true] %s749
          %755 = dma.vmem_to_hbm [thread:$0]  %s750, 4096, %s748, %s736, 128, 128, 8
        $region32: #{conv_block_forward.1} parent=27 // pred_fallthru
          _
      $region28: #{conv_block_forward.1} parent=5 // pred_fallthru
        _
      %p756 = scmp.le.s32.totalorder 2, %s11
      // Predicated region
      $region33: #{conv_block_forward.1} parent=5 // pred_check
        %p757 = pneg %p756
      $region34: #{conv_block_forward.1} parent=5 // pred_check_branch
        %759 = sbr.rel (%p757) target = $region36
      $region35: #{conv_block_forward.1} parent=5 // pred_region
        %s760 = ssub.s32 %s11, 2
        // Predicated region
        $region37: #{conv_block_forward.1} parent=35 // pred_check
          %p761 = pneg %p87
        $region38: #{conv_block_forward.1} parent=35 // pred_check_branch
          %763 = sbr.rel (%p761) target = $region40
        $region39: #{conv_block_forward.1} parent=35 // pred_region
          %s764 = sand.u32 %s72, 1
          %s765 = scalar_lea.sflag [#allocation3], %s764
          %s766 = sand.u32 %s72, 1
          %s767 = smul.addr %s766, 256
          %s768 = scalar_lea.vmem [#allocation2], %s767
          %769 = dma.done %s765, 4096
        $region40: #{conv_block_forward.1} parent=35 // pred_fallthru
          _
      $region36: #{conv_block_forward.1} parent=5 // pred_fallthru
        _
    $region6: #{conv_block_forward.1} parent=1 // loop_footer
      %s15 = sadd.s32 1, %s11
    $region7: #{conv_block_forward.1} parent=1 // loop_footer_branch
      %10 = sbr.rel target = $region3
    $region8: #{conv_block_forward.1} parent=1 // loop_exit
      _
    %770 = vsyncpa [#allocation3], 1
    %s771 = scalar_lea.sflag [#allocation3], 1
    %772 = vsyncpa %s771, 1

</llo_original>
